<compile_context>
chip_gen: v6e
topology: v6e:2x2x1
jax: 0.10.0
libtpu: 0.0.40
codegen_flags: <defaults>
</compile_context>

<pallas_src>
import functools

import jax
import jax.numpy as jnp
from jax.experimental import pallas as pl
from jax.experimental.pallas import tpu as pltpu


def _round_up(x, m):
    return ((x + m - 1) // m) * m


def _cdiv(a, b):
    return -(-a // b)


def _vae_forward_kernel(
    x_ref, eps_ref,
    w1_ref, b1_ref,
    wh_ref, bh_ref,
    w3_ref, b3_ref,
    w4_ref, b4_ref,
    recon_ref, heads_ref,
    *, lat_pad, approx_sigmoid,
):
    # Weights / x are already in the compute dtype (pre-cast in the wrapper);
    # only the in-kernel activations need casting before each MXU matmul.
    cd = w1_ref.dtype

    # encode: h1 = relu(x @ W1 + b1)   (bias add / relu in f32)
    h1 = jnp.dot(x_ref[...], w1_ref[...], preferred_element_type=jnp.float32)
    h1 = jnp.maximum(h1 + b1_ref[...], 0.0)

    # fused, lane-aligned mu|logvar heads: one matmul -> [TILE_B, 2*lat_pad]
    heads = jnp.dot(h1.astype(cd), wh_ref[...],
                    preferred_element_type=jnp.float32) + bh_ref[...]
    heads_ref[...] = heads.astype(heads_ref.dtype)  # packed writeback; split in wrapper

    mu = heads[:, :lat_pad]          # vreg-aligned 128-lane slices
    logvar = heads[:, lat_pad:]

    # reparameterize: z = mu + eps * exp(0.5 * logvar)   (all f32)
    # Pad lanes: logvar/eps/mu pads are exactly zero -> z pad lanes are zero.
    z = mu + eps_ref[...] * jnp.exp(0.5 * logvar)

    # decode: h3 = relu(z @ W3 + b3); recon = sigmoid(h3 @ W4 + b4)
    h3 = jnp.dot(z.astype(cd), w3_ref[...], preferred_element_type=jnp.float32)
    h3 = jnp.maximum(h3 + b3_ref[...], 0.0)
    logits = jnp.dot(h3.astype(cd), w4_ref[...],
                     preferred_element_type=jnp.float32) + b4_ref[...]
    if approx_sigmoid:
        # EUP path (non-parity): exp + approximate reciprocal, no VALU divide.
        recon = pl.reciprocal(1.0 + jnp.exp(-logits), approx=True)
    else:
        recon = jax.nn.sigmoid(logits)
    recon_ref[...] = recon.astype(recon_ref.dtype)


def _choose_tile_b(B):
    # Big tiles fill the 256-wide MXU M dim and amortize per-step grid
    # overhead (sweep 256-512 on v6e/v7x, 128-256 on v5e).
    tb = min(256, _round_up(B, 8))
    steps = _cdiv(B, tb)
    # v7x megacore: the batch grid shards across 2 TensorCores, so prefer an
    # even, >= 2-step grid.  Halve the tile when B would give a single step.
    if steps == 1 and tb > 8:
        tb = _round_up(_cdiv(tb, 2), 8)
        steps = _cdiv(B, tb)
    if steps > 1 and steps % 2 == 1:
        tb_even = _round_up(_cdiv(B, steps + 1), 8)
        if tb_even >= 8 and _cdiv(B, tb_even) % 2 == 0:
            tb = tb_even
    return tb


def linear_vae_forward(x, params, eps, *, tile_b=None,
                       compute_dtype=jnp.bfloat16, out_dtype=jnp.float32):
    """Full VAE forward in one Pallas call, tiled over the batch.

    compute_dtype: dtype of the MXU matmul inputs (f32 accumulation always).
                   bf16 default for v5e/v6e/v7x throughput; pass jnp.float32
                   for exact parity with the PyTorch reference.
    out_dtype:     dtype of the reconstruction writeback (mu/logvar stay f32).
    """
    B, input_dim = x.shape
    hidden_dim = params["w1"].shape[1]
    latent_dim = params["w_mu"].shape[1]
    compute_dtype = jnp.dtype(compute_dtype)
    approx_sigmoid = compute_dtype != jnp.dtype(jnp.float32)

    # --- Lane-aligned fused heads: mu and logvar each padded to 128 lanes. ---
    lat_pad = _round_up(latent_dim, 128)
    heads_pad = 2 * lat_pad
    w_heads = jnp.zeros((hidden_dim, heads_pad), jnp.float32)
    w_heads = w_heads.at[:, :latent_dim].set(params["w_mu"])
    w_heads = w_heads.at[:, lat_pad:lat_pad + latent_dim].set(params["w_logvar"])
    b_heads = jnp.zeros((1, heads_pad), jnp.float32)
    b_heads = b_heads.at[:, :latent_dim].set(params["b_mu"])
    b_heads = b_heads.at[:, lat_pad:lat_pad + latent_dim].set(params["b_logvar"])

    # W3: zero-pad the K rows to lat_pad so z @ W3 uses the aligned z slab.
    w3 = params["w3"]
    if lat_pad != latent_dim:
        w3 = jnp.pad(w3, ((0, lat_pad - latent_dim), (0, 0)))

    # --- Pre-cast weights / x to the compute dtype (once, in the wrapper). ---
    w1_c = params["w1"].astype(compute_dtype)
    wh_c = w_heads.astype(compute_dtype)
    w3_c = w3.astype(compute_dtype)
    w4_c = params["w4"].astype(compute_dtype)
    x_c = x.astype(compute_dtype)
    b1, b3, b4 = params["b1"], params["b3"], params["b4"]   # biases stay f32

    # --- Batch tiling / padding. ---
    if tile_b is None:
        tile_b = _choose_tile_b(B)
    tile_b = _round_up(tile_b, 8)
    b_pad = _round_up(B, tile_b)
    eps_p = jnp.pad(eps, ((0, b_pad - B), (0, lat_pad - latent_dim)))  # pad lanes == 0
    if b_pad != B:
        x_c = jnp.pad(x_c, ((0, b_pad - B), (0, 0)))
    grid = (b_pad // tile_b,)

    def batch_spec(feat):
        return pl.BlockSpec((tile_b, feat), lambda i: (i, 0))

    def resident(shape):
        # Same block every grid step -> stays resident in VMEM (loaded once).
        return pl.BlockSpec(shape, lambda i: (0, 0))

    # --- Cost estimate + VMEM budget. ---
    w_item = compute_dtype.itemsize
    out_item = jnp.dtype(out_dtype).itemsize
    flops = 2 * b_pad * (input_dim * hidden_dim + hidden_dim * heads_pad
                         + lat_pad * hidden_dim + hidden_dim * input_dim)
    transcendentals = b_pad * (lat_pad + input_dim)
    bytes_accessed = (x_c.size * w_item + eps_p.size * 4
                      + (w1_c.size + wh_c.size + w3_c.size + w4_c.size) * w_item
                      + (b1.size + b_heads.size + b3.size + b4.size) * 4
                      + b_pad * input_dim * out_item + b_pad * heads_pad * 4)

    weight_bytes = ((w1_c.size + wh_c.size + w3_c.size + w4_c.size) * w_item
                    + (b1.size + b_heads.size + b3.size + b4.size) * 4)
    act_tile_bytes = tile_b * (input_dim * w_item + lat_pad * 4
                               + input_dim * out_item + heads_pad * 4)
    vmem_needed = 2 * weight_bytes + 2 * act_tile_bytes   # default double-buffering
    vmem_limit_bytes = int(min(max(32 << 20, 2 * vmem_needed), 64 << 20))

    kernel = functools.partial(_vae_forward_kernel,
                               lat_pad=lat_pad,
                               approx_sigmoid=approx_sigmoid)

    recon, heads = pl.pallas_call(
        kernel,
        out_shape=(
            jax.ShapeDtypeStruct((b_pad, input_dim), out_dtype),    # recon
            jax.ShapeDtypeStruct((b_pad, heads_pad), jnp.float32),  # mu|logvar packed
        ),
        grid=grid,
        in_specs=[
            batch_spec(input_dim),               # x (compute dtype)
            batch_spec(lat_pad),                 # eps (f32, lane-padded with zeros)
            resident((input_dim, hidden_dim)),   # w1
            resident((1, hidden_dim)),           # b1
            resident((hidden_dim, heads_pad)),   # w_heads (mu|logvar fused, lane-aligned)
            resident((1, heads_pad)),            # b_heads
            resident((lat_pad, hidden_dim)),     # w3 (K rows zero-padded)
            resident((1, hidden_dim)),           # b3
            resident((hidden_dim, input_dim)),   # w4
            resident((1, input_dim)),            # b4
        ],
        out_specs=(
            pl.BlockSpec((tile_b, input_dim), lambda i: (i, 0)),
            pl.BlockSpec((tile_b, heads_pad), lambda i: (i, 0)),
        ),
        compiler_params=pltpu.CompilerParams(
            dimension_semantics=("parallel",),   # batch grid shards across TCs on v7x
            vmem_limit_bytes=vmem_limit_bytes),
        cost_estimate=pl.CostEstimate(
            flops=flops,
            transcendentals=transcendentals,
            bytes_accessed=bytes_accessed),
    )(x_c, eps_p,
      w1_c, b1,
      wh_c, b_heads,
      w3_c, b3,
      w4_c, b4)

    recon = recon[:B]
    mu = heads[:B, :latent_dim]
    logvar = heads[:B, lat_pad:lat_pad + latent_dim]
    return recon, mu, logvar


def init_params(key, input_dim, hidden_dim, latent_dim):
    """PyTorch-style uniform(-1/sqrt(fan_in), 1/sqrt(fan_in)) init.
    Weights stored pre-transposed: [in_features, out_features]."""
    def linear(key, fan_in, fan_out):
        kw, kb = jax.random.split(key)
        bound = 1.0 / jnp.sqrt(fan_in)
        w = jax.random.uniform(kw, (fan_in, fan_out), jnp.float32, -bound, bound)
        b = jax.random.uniform(kb, (1, fan_out), jnp.float32, -bound, bound)
        return w, b

    k1, k2, k3, k4, k5 = jax.random.split(key, 5)
    w1, b1 = linear(k1, input_dim, hidden_dim)
    w_mu, b_mu = linear(k2, hidden_dim, latent_dim)
    w_lv, b_lv = linear(k3, hidden_dim, latent_dim)
    w3, b3 = linear(k4, latent_dim, hidden_dim)
    w4, b4 = linear(k5, hidden_dim, input_dim)
    return {
        "w1": w1, "b1": b1,
        "w_mu": w_mu, "b_mu": b_mu,
        "w_logvar": w_lv, "b_logvar": b_lv,
        "w3": w3, "b3": b3,
        "w4": w4, "b4": b4,
    }


def _reference_forward(x, params, eps):
    """Pure-JAX reference mirroring the PyTorch module."""
    h1 = jnp.maximum(x @ params["w1"] + params["b1"], 0.0)
    mu = h1 @ params["w_mu"] + params["b_mu"]
    logvar = h1 @ params["w_logvar"] + params["b_logvar"]
    z = mu + eps * jnp.exp(0.5 * logvar)
    h3 = jnp.maximum(z @ params["w3"] + params["b3"], 0.0)
    recon = jax.nn.sigmoid(h3 @ params["w4"] + params["b4"])
    return recon, mu, logvar


if __name__ == "__main__":
    # Small shapes consistent with the Linear stack (input -> hidden -> latent).
    B, INPUT_DIM, HIDDEN_DIM, LATENT_DIM = 20, 256, 128, 32

    key = jax.random.PRNGKey(0)
    k_params, k_x, k_eps = jax.random.split(key, 3)

    params = init_params(k_params, INPUT_DIM, HIDDEN_DIM, LATENT_DIM)
    x = jax.random.normal(k_x, (B, INPUT_DIM), jnp.float32)
    eps = jax.random.normal(k_eps, (B, LATENT_DIM), jnp.float32)  # torch.randn_like(std)

    recon_ref, mu_ref, logvar_ref = _reference_forward(x, params, eps)

    # f32 parity path (tile heuristic -> even 2-step batch grid at B=20).
    recon, mu, logvar = linear_vae_forward(x, params, eps, compute_dtype=jnp.float32)
    jax.block_until_ready((recon, mu, logvar))
    assert recon.shape == (B, INPUT_DIM) and mu.shape == (B, LATENT_DIM)
    assert jnp.allclose(recon, recon_ref, atol=1e-5, rtol=1e-5)
    assert jnp.allclose(mu, mu_ref, atol=1e-5, rtol=1e-5)
    assert jnp.allclose(logvar, logvar_ref, atol=1e-5, rtol=1e-5)

    # Default bf16 MXU path (f32 accumulation) — loose-tolerance smoke check.
    recon_bf, mu_bf, logvar_bf = linear_vae_forward(x, params, eps)
    jax.block_until_ready((recon_bf, mu_bf, logvar_bf))
    assert jnp.allclose(recon_bf, recon_ref, atol=5e-2, rtol=5e-2)
    assert jnp.allclose(mu_bf, mu_ref, atol=5e-2, rtol=5e-2)
    assert jnp.allclose(logvar_bf, logvar_ref, atol=5e-2, rtol=5e-2)

    print("KERNEL_OK")
</pallas_src>

<mosaic_0001>
module attributes {stable_mosaic.version = 11 : i64} {
  func.func @_vae_forward_kernel(%arg0: i32, %arg1: memref<16x256xf32, #tpu.memory_space<vmem>>, %arg2: memref<16x128xf32, #tpu.memory_space<vmem>>, %arg3: memref<256x128xf32, #tpu.memory_space<vmem>>, %arg4: memref<1x128xf32, #tpu.memory_space<vmem>>, %arg5: memref<128x256xf32, #tpu.memory_space<vmem>>, %arg6: memref<1x256xf32, #tpu.memory_space<vmem>>, %arg7: memref<128x128xf32, #tpu.memory_space<vmem>>, %arg8: memref<1x128xf32, #tpu.memory_space<vmem>>, %arg9: memref<128x256xf32, #tpu.memory_space<vmem>>, %arg10: memref<1x256xf32, #tpu.memory_space<vmem>>, %arg11: memref<16x256xf32, #tpu.memory_space<vmem>>, %arg12: memref<16x256xf32, #tpu.memory_space<vmem>>) attributes {dimension_semantics = [#tpu.dimension_semantics<parallel>], iteration_bounds = array<i64: 2>, scalar_prefetch = 0 : i64, scratch_operands = 0 : i64, tpu.core_type = #tpu.core_type<tc>, window_params = [{transform_indices = @transform_0, window_bounds = array<i64: 16, 256>}, {transform_indices = @transform_1, window_bounds = array<i64: 16, 128>}, {pipeline_mode = #tpu.pipeline_mode<synchronous>, transform_indices = @transform_2, window_bounds = array<i64: 256, 128>}, {pipeline_mode = #tpu.pipeline_mode<synchronous>, transform_indices = @transform_3, window_bounds = array<i64: 1, 128>}, {pipeline_mode = #tpu.pipeline_mode<synchronous>, transform_indices = @transform_4, window_bounds = array<i64: 128, 256>}, {pipeline_mode = #tpu.pipeline_mode<synchronous>, transform_indices = @transform_5, window_bounds = array<i64: 1, 256>}, {pipeline_mode = #tpu.pipeline_mode<synchronous>, transform_indices = @transform_6, window_bounds = array<i64: 128, 128>}, {pipeline_mode = #tpu.pipeline_mode<synchronous>, transform_indices = @transform_7, window_bounds = array<i64: 1, 128>}, {pipeline_mode = #tpu.pipeline_mode<synchronous>, transform_indices = @transform_8, window_bounds = array<i64: 128, 256>}, {pipeline_mode = #tpu.pipeline_mode<synchronous>, transform_indices = @transform_9, window_bounds = array<i64: 1, 256>}, {transform_indices = @transform_10, window_bounds = array<i64: 16, 256>}, {transform_indices = @transform_11, window_bounds = array<i64: 16, 256>}]} {
    %c0 = arith.constant 0 : index
    %c0_0 = arith.constant 0 : index
    %0 = vector.load %arg1[%c0, %c0_0] : memref<16x256xf32, #tpu.memory_space<vmem>>, vector<16x256xf32>
    %c0_1 = arith.constant 0 : index
    %c0_2 = arith.constant 0 : index
    %1 = vector.load %arg3[%c0_1, %c0_2] : memref<256x128xf32, #tpu.memory_space<vmem>>, vector<256x128xf32>
    %cst = arith.constant dense<0.000000e+00> : vector<16x128xf32>
    %2 = tpu.matmul %0, %1, %cst {dimension_numbers = #tpu.dot_dimension_numbers<[1], [0], [0], [1], [0, 0, 1, 1], [], []>} : vector<16x256xf32>, vector<256x128xf32>, vector<16x128xf32> -> vector<16x128xf32>
    %c0_3 = arith.constant 0 : index
    %c0_4 = arith.constant 0 : index
    %3 = vector.load %arg4[%c0_3, %c0_4] : memref<1x128xf32, #tpu.memory_space<vmem>>, vector<1x128xf32>
    %4 = vector.broadcast %3 : vector<1x128xf32> to vector<16x128xf32>
    %5 = arith.addf %2, %4 : vector<16x128xf32>
    %cst_5 = arith.constant 0.000000e+00 : f32
    %6 = vector.broadcast %cst_5 : f32 to vector<16x128xf32>
    %7 = arith.maximumf %5, %6 : vector<16x128xf32>
    %c0_6 = arith.constant 0 : index
    %c0_7 = arith.constant 0 : index
    %8 = vector.load %arg5[%c0_6, %c0_7] : memref<128x256xf32, #tpu.memory_space<vmem>>, vector<128x256xf32>
    %cst_8 = arith.constant dense<0.000000e+00> : vector<16x256xf32>
    %9 = tpu.matmul %7, %8, %cst_8 {dimension_numbers = #tpu.dot_dimension_numbers<[1], [0], [0], [1], [0, 0, 1, 1], [], []>} : vector<16x128xf32>, vector<128x256xf32>, vector<16x256xf32> -> vector<16x256xf32>
    %c0_9 = arith.constant 0 : index
    %c0_10 = arith.constant 0 : index
    %10 = vector.load %arg6[%c0_9, %c0_10] : memref<1x256xf32, #tpu.memory_space<vmem>>, vector<1x256xf32>
    %11 = vector.broadcast %10 : vector<1x256xf32> to vector<16x256xf32>
    %12 = arith.addf %9, %11 : vector<16x256xf32>
    %c0_11 = arith.constant 0 : index
    %c0_12 = arith.constant 0 : index
    %13 = vector.load %arg12[%c0_11, %c0_12] : memref<16x256xf32, #tpu.memory_space<vmem>>, vector<16x256xf32>
    tpu.vector_store %arg12[%c0_11, %c0_12], %12 {strides = array<i32>} : memref<16x256xf32, #tpu.memory_space<vmem>>, vector<16x256xf32>,
    %14 = vector.extract_strided_slice %12 {offsets = [0, 0], sizes = [16, 128], strides = [1, 1]} : vector<16x256xf32> to vector<16x128xf32>
    %15 = vector.extract_strided_slice %12 {offsets = [0, 128], sizes = [16, 128], strides = [1, 1]} : vector<16x256xf32> to vector<16x128xf32>
    %c0_13 = arith.constant 0 : index
    %c0_14 = arith.constant 0 : index
    %16 = vector.load %arg2[%c0_13, %c0_14] : memref<16x128xf32, #tpu.memory_space<vmem>>, vector<16x128xf32>
    %cst_15 = arith.constant 5.000000e-01 : f32
    %17 = vector.broadcast %cst_15 : f32 to vector<16x128xf32>
    %18 = arith.mulf %17, %15 : vector<16x128xf32>
    %19 = math.exp %18 : vector<16x128xf32>
    %20 = arith.mulf %16, %19 : vector<16x128xf32>
    %21 = arith.addf %14, %20 : vector<16x128xf32>
    %c0_16 = arith.constant 0 : index
    %c0_17 = arith.constant 0 : index
    %22 = vector.load %arg7[%c0_16, %c0_17] : memref<128x128xf32, #tpu.memory_space<vmem>>, vector<128x128xf32>
    %cst_18 = arith.constant dense<0.000000e+00> : vector<16x128xf32>
    %23 = tpu.matmul %21, %22, %cst_18 {dimension_numbers = #tpu.dot_dimension_numbers<[1], [0], [0], [1], [0, 0, 1, 1], [], []>} : vector<16x128xf32>, vector<128x128xf32>, vector<16x128xf32> -> vector<16x128xf32>
    %c0_19 = arith.constant 0 : index
    %c0_20 = arith.constant 0 : index
    %24 = vector.load %arg8[%c0_19, %c0_20] : memref<1x128xf32, #tpu.memory_space<vmem>>, vector<1x128xf32>
    %25 = vector.broadcast %24 : vector<1x128xf32> to vector<16x128xf32>
    %26 = arith.addf %23, %25 : vector<16x128xf32>
    %cst_21 = arith.constant 0.000000e+00 : f32
    %27 = vector.broadcast %cst_21 : f32 to vector<16x128xf32>
    %28 = arith.maximumf %26, %27 : vector<16x128xf32>
    %c0_22 = arith.constant 0 : index
    %c0_23 = arith.constant 0 : index
    %29 = vector.load %arg9[%c0_22, %c0_23] : memref<128x256xf32, #tpu.memory_space<vmem>>, vector<128x256xf32>
    %cst_24 = arith.constant dense<0.000000e+00> : vector<16x256xf32>
    %30 = tpu.matmul %28, %29, %cst_24 {dimension_numbers = #tpu.dot_dimension_numbers<[1], [0], [0], [1], [0, 0, 1, 1], [], []>} : vector<16x128xf32>, vector<128x256xf32>, vector<16x256xf32> -> vector<16x256xf32>
    %c0_25 = arith.constant 0 : index
    %c0_26 = arith.constant 0 : index
    %31 = vector.load %arg10[%c0_25, %c0_26] : memref<1x256xf32, #tpu.memory_space<vmem>>, vector<1x256xf32>
    %32 = vector.broadcast %31 : vector<1x256xf32> to vector<16x256xf32>
    %33 = arith.addf %30, %32 : vector<16x256xf32>
    %34 = arith.negf %33 : vector<16x256xf32>
    %35 = math.exp %34 : vector<16x256xf32>
    %cst_27 = arith.constant 1.000000e+00 : f32
    %36 = vector.broadcast %cst_27 : f32 to vector<16x256xf32>
    %37 = arith.addf %36, %35 : vector<16x256xf32>
    %38 = arith.divf %36, %37 : vector<16x256xf32>
    %c0_28 = arith.constant 0 : index
    %c0_29 = arith.constant 0 : index
    %39 = vector.load %arg11[%c0_28, %c0_29] : memref<16x256xf32, #tpu.memory_space<vmem>>, vector<16x256xf32>
    tpu.vector_store %arg11[%c0_28, %c0_29], %38 {strides = array<i32>} : memref<16x256xf32, #tpu.memory_space<vmem>>, vector<16x256xf32>,
    return
  }
  func.func @transform_0(%arg0: i32) -> (i32, i32) {
    %c0_i32 = arith.constant 0 : i32
    %c0_i32_0 = arith.constant 0 : i32
    return %arg0, %c0_i32 : i32, i32
  }
  func.func @transform_1(%arg0: i32) -> (i32, i32) {
    %c0_i32 = arith.constant 0 : i32
    %c0_i32_0 = arith.constant 0 : i32
    return %arg0, %c0_i32 : i32, i32
  }
  func.func @transform_2(%arg0: i32) -> (i32, i32) {
    %c0_i32 = arith.constant 0 : i32
    %c0_i32_0 = arith.constant 0 : i32
    %c0_i32_1 = arith.constant 0 : i32
    return %c0_i32, %c0_i32_0 : i32, i32
  }
  func.func @transform_3(%arg0: i32) -> (i32, i32) {
    %c0_i32 = arith.constant 0 : i32
    %c0_i32_0 = arith.constant 0 : i32
    %c0_i32_1 = arith.constant 0 : i32
    return %c0_i32, %c0_i32_0 : i32, i32
  }
  func.func @transform_4(%arg0: i32) -> (i32, i32) {
    %c0_i32 = arith.constant 0 : i32
    %c0_i32_0 = arith.constant 0 : i32
    %c0_i32_1 = arith.constant 0 : i32
    return %c0_i32, %c0_i32_0 : i32, i32
  }
  func.func @transform_5(%arg0: i32) -> (i32, i32) {
    %c0_i32 = arith.constant 0 : i32
    %c0_i32_0 = arith.constant 0 : i32
    %c0_i32_1 = arith.constant 0 : i32
    return %c0_i32, %c0_i32_0 : i32, i32
  }
  func.func @transform_6(%arg0: i32) -> (i32, i32) {
    %c0_i32 = arith.constant 0 : i32
    %c0_i32_0 = arith.constant 0 : i32
    %c0_i32_1 = arith.constant 0 : i32
    return %c0_i32, %c0_i32_0 : i32, i32
  }
  func.func @transform_7(%arg0: i32) -> (i32, i32) {
    %c0_i32 = arith.constant 0 : i32
    %c0_i32_0 = arith.constant 0 : i32
    %c0_i32_1 = arith.constant 0 : i32
    return %c0_i32, %c0_i32_0 : i32, i32
  }
  func.func @transform_8(%arg0: i32) -> (i32, i32) {
    %c0_i32 = arith.constant 0 : i32
    %c0_i32_0 = arith.constant 0 : i32
    %c0_i32_1 = arith.constant 0 : i32
    return %c0_i32, %c0_i32_0 : i32, i32
  }
  func.func @transform_9(%arg0: i32) -> (i32, i32) {
    %c0_i32 = arith.constant 0 : i32
    %c0_i32_0 = arith.constant 0 : i32
    %c0_i32_1 = arith.constant 0 : i32
    return %c0_i32, %c0_i32_0 : i32, i32
  }
  func.func @transform_10(%arg0: i32) -> (i32, i32) {
    %c0_i32 = arith.constant 0 : i32
    %c0_i32_0 = arith.constant 0 : i32
    return %arg0, %c0_i32 : i32, i32
  }
  func.func @transform_11(%arg0: i32) -> (i32, i32) {
    %c0_i32 = arith.constant 0 : i32
    %c0_i32_0 = arith.constant 0 : i32
    return %arg0, %c0_i32 : i32, i32
  }
}

</mosaic_0001>

<llo_original>
// kernel: tpu_custom_call.1
$region0: #{tpu_custom_call.1}
  #allocation0 [shape = 'u32[]', space=smem, size = 0x4, offset = 0x4, fixed_abs, tag = 'smem constant byte address 0x4 - core index']
  #allocation1 [shape = 'u32[144,128]{1,0:T(1,128)}', space=vmem, size = 0x12000, scoped, tag = 'internal scratch']
  %s0 = inlined_call_operand.hbm [shape: f32[32,256], index: 0, kind: input, shape index: {}]
  %s1 = inlined_call_operand.hbm [shape: f32[32,128], index: 1, kind: input, shape index: {}]
  %s2 = inlined_call_operand.hbm [shape: f32[256,128], index: 2, kind: input, shape index: {}]
  %s3 = inlined_call_operand.vmem [shape: f32[1,128], index: 3, kind: input, shape index: {}]
  %s4 = inlined_call_operand.hbm [shape: f32[128,256], index: 4, kind: input, shape index: {}]
  %s5 = inlined_call_operand.vmem [shape: f32[1,256], index: 5, kind: input, shape index: {}]
  %s6 = inlined_call_operand.hbm [shape: f32[128,128], index: 6, kind: input, shape index: {}]
  %s7 = inlined_call_operand.vmem [shape: f32[1,128], index: 7, kind: input, shape index: {}]
  %s8 = inlined_call_operand.hbm [shape: f32[128,256], index: 8, kind: input, shape index: {}]
  %s9 = inlined_call_operand.vmem [shape: f32[1,256], index: 9, kind: input, shape index: {}]
  %s10 = inlined_call_operand.hbm [shape: f32[32,256], index: 10, kind: output, shape index: {0}]
  %s11 = inlined_call_operand.hbm [shape: f32[32,256], index: 11, kind: output, shape index: {1}]
  %12 = xla_tuple %s10, %s11
  %s13 = sld [smem:[#allocation0]]
  $region105: #{tpu_custom_call.1} parent=0
    _
  %s15 = ssub.s32 1, %s13
  %s16 = scalar_select 0, %s15, %s13
  $region1: #{tpu_custom_call.1} parent=0
    #allocation2 [shape = 'u8[32768]{0}', space=vmem, size = 0x8000, scoped, tag = 'input window, operand 0']
    #allocation3 [shape = 's32[2]{0}', space=sflag, size = 0x8, scoped, tag = 'scoped memory for tpu_custom_call.1']
    #allocation4 [shape = 's32[2]{0}', space=sflag, size = 0x8, scoped, tag = 'scoped memory for tpu_custom_call.1']
    #allocation5 [shape = 'u8[16384]{0}', space=vmem, size = 0x4000, scoped, tag = 'input window, operand 1']
    #allocation6 [shape = 's32[2]{0}', space=sflag, size = 0x8, scoped, tag = 'scoped memory for tpu_custom_call.1']
    #allocation7 [shape = 'u8[131072]{0}', space=vmem, size = 0x20000, scoped, tag = 'input window, operand 2, single buffered']
    #allocation8 [shape = 'u8[131072]{0}', space=vmem, size = 0x20000, scoped, tag = 'input window, operand 4, single buffered']
    #allocation9 [shape = 's32[1]{0}', space=sflag, size = 0x4, scoped, tag = 'scoped memory for tpu_custom_call.1']
    #allocation10 [shape = 'u8[65536]{0}', space=vmem, size = 0x10000, scoped, tag = 'input window, operand 6, single buffered']
    #allocation11 [shape = 'u8[131072]{0}', space=vmem, size = 0x20000, scoped, tag = 'input window, operand 8, single buffered']
    #allocation12 [shape = 's32[1]{0}', space=sflag, size = 0x4, scoped, tag = 'scoped memory for tpu_custom_call.1']
    #allocation13 [shape = 'u8[32768]{0}', space=vmem, size = 0x8000, scoped, tag = 'output window, operand 0']
    #allocation14 [shape = 'u8[32768]{0}', space=vmem, size = 0x8000, scoped, tag = 'output window, operand 1']
    #allocation15 [shape = 's32[2]{0}', space=sflag, size = 0x8, scoped, tag = 'scoped memory for tpu_custom_call.1']
    %17 = vsyncpa [#allocation3], 0
    %s18 = scalar_lea.sflag [#allocation3], 1
    %19 = vsyncpa %s18, 0
    %20 = vsyncpa [#allocation6], 0
    %s21 = scalar_lea.sflag [#allocation6], 1
    %22 = vsyncpa %s21, 0
    %23 = vsyncpa [#allocation9], 0
    %24 = vsyncpa [#allocation12], 0
    %25 = vsyncpa [#allocation4], 0
    %s26 = scalar_lea.sflag [#allocation4], 1
    %27 = vsyncpa %s26, 0
    %28 = vsyncpa [#allocation15], 0
    %s29 = scalar_lea.sflag [#allocation15], 1
    %30 = vsyncpa %s29, 0
    loop: start=0, step=1, limit=4
    $region2: #{tpu_custom_call.1} parent=1 // loop_pre_header
      _
    $region3: #{tpu_custom_call.1} parent=1 // loop_header
      %s32 = sphi 0, %s36
      %p33 = scmp.ge.s32.totalorder %s32, 4
      %s42 = sphi 0, %s44
      %s45 = sphi 0, %s42
      %s46 = sphi 0, %s45
      %s62 = sphi 0, %s46
      %s68 = sphi 0, %s70
      %s71 = sphi 0, %s68
      %s72 = sphi 0, %s71
      %s88 = sphi 0, %s72
      %s92 = sphi 0, %s92
      %s94 = sphi 0, %s92
      %s95 = sphi 0, %s94
      %s109 = sphi 0, %s95
      %s113 = sphi 0, %s113
      %s115 = sphi 0, %s113
      %s116 = sphi 0, %s115
      %s130 = sphi 0, %s116
      %s134 = sphi 0, %s134
      %s136 = sphi 0, %s134
      %s137 = sphi 0, %s136
      %s151 = sphi 0, %s137
      %s155 = sphi 0, %s155
      %s157 = sphi 0, %s155
      %s158 = sphi 0, %s157
      %s172 = sphi 0, %s158
      %s176 = sphi 0, %s176
      %s178 = sphi 0, %s176
      %s179 = sphi 0, %s178
      %s193 = sphi 0, %s179
      %s197 = sphi 0, %s197
      %s199 = sphi 0, %s197
      %s200 = sphi 0, %s199
      %s214 = sphi 0, %s200
      %s218 = sphi 0, %s218
      %s220 = sphi 0, %s218
      %s221 = sphi 0, %s220
      %s235 = sphi 0, %s221
      %s239 = sphi 0, %s239
      %s241 = sphi 0, %s239
      %s242 = sphi 0, %s241
      %s256 = sphi 0, %s242
      %s262 = sphi 0, %s264
      %s265 = sphi 0, %s262
      %s266 = sphi 0, %s265
      %s282 = sphi 0, %s266
      %s288 = sphi 0, %s290
      %s291 = sphi 0, %s288
      %s292 = sphi 0, %s291
      %s308 = sphi 0, %s292
    $region4: #{tpu_custom_call.1} parent=1 // loop_header_branch
      %35 = sbr.rel (%p33) target = $region8
    $region5: #{tpu_custom_call.1} parent=1 // loop_body
      %s37 = ssub.s32 %s32, 1
      %s38 = ssub.s32 %s32, 2
      %s39 = sadd.s32 %s32, 1
      %s40 = ssub.s32 %s32, %s39
      %p41 = scmp.eq.s32.totalorder %s40, 0
      %s43 = sadd.s32 %s42, 1
      %s44 = scalar_select %p41, %s42, %s43
      %p47 = pneg %p41
      %p48 = scmp.eq.s32.totalorder %s32, 1
      %p49 = por %p47, %p48
      %p50 = scmp.ne.s32.totalorder %s42, %s45
      %p51 = scmp.eq.s32.totalorder %s32, 0
      %p52 = por %p50, %p51
      %p53 = scmp.ne.s32.totalorder %s42, %s45
      %p54 = scmp.eq.s32.totalorder %s37, 1
      %p55 = por %p53, %p54
      %p56 = scmp.ne.s32.totalorder %s45, %s46
      %p57 = scmp.eq.s32.totalorder %s37, 0
      %p58 = por %p56, %p57
      %p59 = scmp.ne.s32.totalorder %s45, %s46
      %p60 = scmp.eq.s32.totalorder %s38, 1
      %p61 = por %p59, %p60
      %p63 = scmp.ne.s32.totalorder %s46, %s62
      %p64 = scmp.eq.s32.totalorder %s38, 0
      %p65 = por %p63, %p64
      %s66 = ssub.s32 %s32, %s39
      %p67 = scmp.eq.s32.totalorder %s66, 0
      %s69 = sadd.s32 %s68, 1
      %s70 = scalar_select %p67, %s68, %s69
      %p73 = pneg %p67
      %p74 = scmp.eq.s32.totalorder %s32, 1
      %p75 = por %p73, %p74
      %p76 = scmp.ne.s32.totalorder %s68, %s71
      %p77 = scmp.eq.s32.totalorder %s32, 0
      %p78 = por %p76, %p77
      %p79 = scmp.ne.s32.totalorder %s68, %s71
      %p80 = scmp.eq.s32.totalorder %s37, 1
      %p81 = por %p79, %p80
      %p82 = scmp.ne.s32.totalorder %s71, %s72
      %p83 = scmp.eq.s32.totalorder %s37, 0
      %p84 = por %p82, %p83
      %p85 = scmp.ne.s32.totalorder %s71, %s72
      %p86 = scmp.eq.s32.totalorder %s38, 1
      %p87 = por %p85, %p86
      %p89 = scmp.ne.s32.totalorder %s72, %s88
      %p90 = scmp.eq.s32.totalorder %s38, 0
      %p91 = por %p89, %p90
      %s93 = sadd.s32 %s92, 1
      %p96 = scmp.eq.s32.totalorder %s32, 1
      %p97 = scmp.ne.s32.totalorder %s92, %s94
      %p98 = scmp.eq.s32.totalorder %s32, 0
      %p99 = por %p97, %p98
      %p100 = scmp.ne.s32.totalorder %s92, %s94
      %p101 = scmp.eq.s32.totalorder %s37, 1
      %p102 = por %p100, %p101
      %p103 = scmp.ne.s32.totalorder %s94, %s95
      %p104 = scmp.eq.s32.totalorder %s37, 0
      %p105 = por %p103, %p104
      %p106 = scmp.ne.s32.totalorder %s94, %s95
      %p107 = scmp.eq.s32.totalorder %s38, 1
      %p108 = por %p106, %p107
      %p110 = scmp.ne.s32.totalorder %s95, %s109
      %p111 = scmp.eq.s32.totalorder %s38, 0
      %p112 = por %p110, %p111
      %s114 = sadd.s32 %s113, 1
      %p117 = scmp.eq.s32.totalorder %s32, 1
      %p118 = scmp.ne.s32.totalorder %s113, %s115
      %p119 = scmp.eq.s32.totalorder %s32, 0
      %p120 = por %p118, %p119
      %p121 = scmp.ne.s32.totalorder %s113, %s115
      %p122 = scmp.eq.s32.totalorder %s37, 1
      %p123 = por %p121, %p122
      %p124 = scmp.ne.s32.totalorder %s115, %s116
      %p125 = scmp.eq.s32.totalorder %s37, 0
      %p126 = por %p124, %p125
      %p127 = scmp.ne.s32.totalorder %s115, %s116
      %p128 = scmp.eq.s32.totalorder %s38, 1
      %p129 = por %p127, %p128
      %p131 = scmp.ne.s32.totalorder %s116, %s130
      %p132 = scmp.eq.s32.totalorder %s38, 0
      %p133 = por %p131, %p132
      %s135 = sadd.s32 %s134, 1
      %p138 = scmp.eq.s32.totalorder %s32, 1
      %p139 = scmp.ne.s32.totalorder %s134, %s136
      %p140 = scmp.eq.s32.totalorder %s32, 0
      %p141 = por %p139, %p140
      %p142 = scmp.ne.s32.totalorder %s134, %s136
      %p143 = scmp.eq.s32.totalorder %s37, 1
      %p144 = por %p142, %p143
      %p145 = scmp.ne.s32.totalorder %s136, %s137
      %p146 = scmp.eq.s32.totalorder %s37, 0
      %p147 = por %p145, %p146
      %p148 = scmp.ne.s32.totalorder %s136, %s137
      %p149 = scmp.eq.s32.totalorder %s38, 1
      %p150 = por %p148, %p149
      %p152 = scmp.ne.s32.totalorder %s137, %s151
      %p153 = scmp.eq.s32.totalorder %s38, 0
      %p154 = por %p152, %p153
      %s156 = sadd.s32 %s155, 1
      %p159 = scmp.eq.s32.totalorder %s32, 1
      %p160 = scmp.ne.s32.totalorder %s155, %s157
      %p161 = scmp.eq.s32.totalorder %s32, 0
      %p162 = por %p160, %p161
      %p163 = scmp.ne.s32.totalorder %s155, %s157
      %p164 = scmp.eq.s32.totalorder %s37, 1
      %p165 = por %p163, %p164
      %p166 = scmp.ne.s32.totalorder %s157, %s158
      %p167 = scmp.eq.s32.totalorder %s37, 0
      %p168 = por %p166, %p167
      %p169 = scmp.ne.s32.totalorder %s157, %s158
      %p170 = scmp.eq.s32.totalorder %s38, 1
      %p171 = por %p169, %p170
      %p173 = scmp.ne.s32.totalorder %s158, %s172
      %p174 = scmp.eq.s32.totalorder %s38, 0
      %p175 = por %p173, %p174
      %s177 = sadd.s32 %s176, 1
      %p180 = scmp.eq.s32.totalorder %s32, 1
      %p181 = scmp.ne.s32.totalorder %s176, %s178
      %p182 = scmp.eq.s32.totalorder %s32, 0
      %p183 = por %p181, %p182
      %p184 = scmp.ne.s32.totalorder %s176, %s178
      %p185 = scmp.eq.s32.totalorder %s37, 1
      %p186 = por %p184, %p185
      %p187 = scmp.ne.s32.totalorder %s178, %s179
      %p188 = scmp.eq.s32.totalorder %s37, 0
      %p189 = por %p187, %p188
      %p190 = scmp.ne.s32.totalorder %s178, %s179
      %p191 = scmp.eq.s32.totalorder %s38, 1
      %p192 = por %p190, %p191
      %p194 = scmp.ne.s32.totalorder %s179, %s193
      %p195 = scmp.eq.s32.totalorder %s38, 0
      %p196 = por %p194, %p195
      %s198 = sadd.s32 %s197, 1
      %p201 = scmp.eq.s32.totalorder %s32, 1
      %p202 = scmp.ne.s32.totalorder %s197, %s199
      %p203 = scmp.eq.s32.totalorder %s32, 0
      %p204 = por %p202, %p203
      %p205 = scmp.ne.s32.totalorder %s197, %s199
      %p206 = scmp.eq.s32.totalorder %s37, 1
      %p207 = por %p205, %p206
      %p208 = scmp.ne.s32.totalorder %s199, %s200
      %p209 = scmp.eq.s32.totalorder %s37, 0
      %p210 = por %p208, %p209
      %p211 = scmp.ne.s32.totalorder %s199, %s200
      %p212 = scmp.eq.s32.totalorder %s38, 1
      %p213 = por %p211, %p212
      %p215 = scmp.ne.s32.totalorder %s200, %s214
      %p216 = scmp.eq.s32.totalorder %s38, 0
      %p217 = por %p215, %p216
      %s219 = sadd.s32 %s218, 1
      %p222 = scmp.eq.s32.totalorder %s32, 1
      %p223 = scmp.ne.s32.totalorder %s218, %s220
      %p224 = scmp.eq.s32.totalorder %s32, 0
      %p225 = por %p223, %p224
      %p226 = scmp.ne.s32.totalorder %s218, %s220
      %p227 = scmp.eq.s32.totalorder %s37, 1
      %p228 = por %p226, %p227
      %p229 = scmp.ne.s32.totalorder %s220, %s221
      %p230 = scmp.eq.s32.totalorder %s37, 0
      %p231 = por %p229, %p230
      %p232 = scmp.ne.s32.totalorder %s220, %s221
      %p233 = scmp.eq.s32.totalorder %s38, 1
      %p234 = por %p232, %p233
      %p236 = scmp.ne.s32.totalorder %s221, %s235
      %p237 = scmp.eq.s32.totalorder %s38, 0
      %p238 = por %p236, %p237
      %s240 = sadd.s32 %s239, 1
      %p243 = scmp.eq.s32.totalorder %s32, 1
      %p244 = scmp.ne.s32.totalorder %s239, %s241
      %p245 = scmp.eq.s32.totalorder %s32, 0
      %p246 = por %p244, %p245
      %p247 = scmp.ne.s32.totalorder %s239, %s241
      %p248 = scmp.eq.s32.totalorder %s37, 1
      %p249 = por %p247, %p248
      %p250 = scmp.ne.s32.totalorder %s241, %s242
      %p251 = scmp.eq.s32.totalorder %s37, 0
      %p252 = por %p250, %p251
      %p253 = scmp.ne.s32.totalorder %s241, %s242
      %p254 = scmp.eq.s32.totalorder %s38, 1
      %p255 = por %p253, %p254
      %p257 = scmp.ne.s32.totalorder %s242, %s256
      %p258 = scmp.eq.s32.totalorder %s38, 0
      %p259 = por %p257, %p258
      %s260 = ssub.s32 %s32, %s39
      %p261 = scmp.eq.s32.totalorder %s260, 0
      %s263 = sadd.s32 %s262, 1
      %s264 = scalar_select %p261, %s262, %s263
      %p267 = pneg %p261
      %p268 = scmp.eq.s32.totalorder %s32, 1
      %p269 = por %p267, %p268
      %p270 = scmp.ne.s32.totalorder %s262, %s265
      %p271 = scmp.eq.s32.totalorder %s32, 0
      %p272 = por %p270, %p271
      %p273 = scmp.ne.s32.totalorder %s262, %s265
      %p274 = scmp.eq.s32.totalorder %s37, 1
      %p275 = por %p273, %p274
      %p276 = scmp.ne.s32.totalorder %s265, %s266
      %p277 = scmp.eq.s32.totalorder %s37, 0
      %p278 = por %p276, %p277
      %p279 = scmp.ne.s32.totalorder %s265, %s266
      %p280 = scmp.eq.s32.totalorder %s38, 1
      %p281 = por %p279, %p280
      %p283 = scmp.ne.s32.totalorder %s266, %s282
      %p284 = scmp.eq.s32.totalorder %s38, 0
      %p285 = por %p283, %p284
      %s286 = ssub.s32 %s32, %s39
      %p287 = scmp.eq.s32.totalorder %s286, 0
      %s289 = sadd.s32 %s288, 1
      %s290 = scalar_select %p287, %s288, %s289
      %p293 = pneg %p287
      %p294 = scmp.eq.s32.totalorder %s32, 1
      %p295 = por %p293, %p294
      %p296 = scmp.ne.s32.totalorder %s288, %s291
      %p297 = scmp.eq.s32.totalorder %s32, 0
      %p298 = por %p296, %p297
      %p299 = scmp.ne.s32.totalorder %s288, %s291
      %p300 = scmp.eq.s32.totalorder %s37, 1
      %p301 = por %p299, %p300
      %p302 = scmp.ne.s32.totalorder %s291, %s292
      %p303 = scmp.eq.s32.totalorder %s37, 0
      %p304 = por %p302, %p303
      %p305 = scmp.ne.s32.totalorder %s291, %s292
      %p306 = scmp.eq.s32.totalorder %s38, 1
      %p307 = por %p305, %p306
      %p309 = scmp.ne.s32.totalorder %s292, %s308
      %p310 = scmp.eq.s32.totalorder %s38, 0
      %p311 = por %p309, %p310
      %p312 = scmp.le.s32.totalorder 1, %s32
      %p313 = scmp.lt.s32.totalorder %s32, 3
      %p314 = pnand %p312, %p313
      %p315 = pneg %p314
      // Predicated region
      $region9: #{tpu_custom_call.1} parent=5 // pred_check
        _
      $region10: #{tpu_custom_call.1} parent=5 // pred_check_branch
        %317 = sbr.rel (%p314) target = $region12
      $region11: #{tpu_custom_call.1} parent=5 // pred_region
        %s318 = ssub.s32 %s32, 1
        // Predicated region
        $region13: #{tpu_custom_call.1} parent=11 // pred_check
          %p319 = pneg %p105
        $region14: #{tpu_custom_call.1} parent=11 // pred_check_branch
          %321 = sbr.rel (%p319) target = $region16
        $region15: #{tpu_custom_call.1} parent=11 // pred_region
          %s323 = ssub.s32 4096, 4096
          %324 = vsyncadd [#allocation6], %s323
          %s325 = sshll.u32 [#allocation7], 4
          %s326 = int_to_ptr.vmem [resolvable:$true] %s325
          %331 = dma.hbm_to_vmem [thread:$0]  %s2, 4096, %s326, [#allocation6], 128, 128, 8
        $region16: #{tpu_custom_call.1} parent=11 // pred_fallthru
          _
        // Predicated region
        $region17: #{tpu_custom_call.1} parent=11 // pred_check
          %p332 = pneg %p126
        $region18: #{tpu_custom_call.1} parent=11 // pred_check_branch
          %334 = sbr.rel (%p332) target = $region20
        $region19: #{tpu_custom_call.1} parent=11 // pred_region
          _
        $region20: #{tpu_custom_call.1} parent=11 // pred_fallthru
          _
        // Predicated region
        $region21: #{tpu_custom_call.1} parent=11 // pred_check
          %p335 = pneg %p147
        $region22: #{tpu_custom_call.1} parent=11 // pred_check_branch
          %337 = sbr.rel (%p335) target = $region24
        $region23: #{tpu_custom_call.1} parent=11 // pred_region
          %s339 = ssub.s32 4096, 4096
          %340 = vsyncadd [#allocation9], %s339
          %s341 = sshll.u32 [#allocation8], 4
          %s342 = int_to_ptr.vmem [resolvable:$true] %s341
          %347 = dma.hbm_to_vmem [thread:$0]  %s4, 4096, %s342, [#allocation9], 256, 256, 16
        $region24: #{tpu_custom_call.1} parent=11 // pred_fallthru
          _
        // Predicated region
        $region25: #{tpu_custom_call.1} parent=11 // pred_check
          %p348 = pneg %p168
        $region26: #{tpu_custom_call.1} parent=11 // pred_check_branch
          %350 = sbr.rel (%p348) target = $region28
        $region27: #{tpu_custom_call.1} parent=11 // pred_region
          _
        $region28: #{tpu_custom_call.1} parent=11 // pred_fallthru
          _
        // Predicated region
        $region29: #{tpu_custom_call.1} parent=11 // pred_check
          %p351 = pneg %p189
        $region30: #{tpu_custom_call.1} parent=11 // pred_check_branch
          %353 = sbr.rel (%p351) target = $region32
        $region31: #{tpu_custom_call.1} parent=11 // pred_region
          %s355 = ssub.s32 2048, 2048
          %356 = vsyncadd [#allocation9], %s355
          %s357 = sshll.u32 [#allocation10], 4
          %s358 = int_to_ptr.vmem [resolvable:$true] %s357
          %363 = dma.hbm_to_vmem [thread:$0]  %s6, 2048, %s358, [#allocation9], 128, 128, 8
        $region32: #{tpu_custom_call.1} parent=11 // pred_fallthru
          _
        // Predicated region
        $region33: #{tpu_custom_call.1} parent=11 // pred_check
          %p364 = pneg %p210
        $region34: #{tpu_custom_call.1} parent=11 // pred_check_branch
          %366 = sbr.rel (%p364) target = $region36
        $region35: #{tpu_custom_call.1} parent=11 // pred_region
          _
        $region36: #{tpu_custom_call.1} parent=11 // pred_fallthru
          _
        // Predicated region
        $region37: #{tpu_custom_call.1} parent=11 // pred_check
          %p367 = pneg %p231
        $region38: #{tpu_custom_call.1} parent=11 // pred_check_branch
          %369 = sbr.rel (%p367) target = $region40
        $region39: #{tpu_custom_call.1} parent=11 // pred_region
          %s371 = ssub.s32 4096, 4096
          %372 = vsyncadd [#allocation12], %s371
          %s373 = sshll.u32 [#allocation11], 4
          %s374 = int_to_ptr.vmem [resolvable:$true] %s373
          %379 = dma.hbm_to_vmem [thread:$0]  %s8, 4096, %s374, [#allocation12], 256, 256, 16
        $region40: #{tpu_custom_call.1} parent=11 // pred_fallthru
          _
        // Predicated region
        $region41: #{tpu_custom_call.1} parent=11 // pred_check
          %p380 = pneg %p252
        $region42: #{tpu_custom_call.1} parent=11 // pred_check_branch
          %382 = sbr.rel (%p380) target = $region44
        $region43: #{tpu_custom_call.1} parent=11 // pred_region
          _
        $region44: #{tpu_custom_call.1} parent=11 // pred_fallthru
          _
      $region12: #{tpu_custom_call.1} parent=5 // pred_fallthru
        _
      %p383 = scmp.lt.s32.totalorder %s32, 2
      // Predicated region
      $region45: #{tpu_custom_call.1} parent=5 // pred_check
        %p384 = pneg %p383
      $region46: #{tpu_custom_call.1} parent=5 // pred_check_branch
        %386 = sbr.rel (%p384) target = $region48
      $region47: #{tpu_custom_call.1} parent=5 // pred_region
        // Predicated region
        $region49: #{tpu_custom_call.1} parent=47 // pred_check
          %p387 = pneg %p52
        $region50: #{tpu_custom_call.1} parent=47 // pred_check_branch
          %389 = sbr.rel (%p387) target = $region52
        $region51: #{tpu_custom_call.1} parent=47 // pred_region
          %s390 = sand.u32 %s42, 1
          %s391 = scalar_lea.sflag [#allocation3], %s390
          %s392 = sand.u32 %s42, 1
          %s393 = smul.addr %s392, 32
          %s394 = scalar_lea.vmem [#allocation2], %s393
          %s395 = smul.u32 2, %s32
          %s397 = ssub.s32 512, 512
          %398 = vsyncadd %s391, %s397
          %s399 = smul.addr %s395, 2
          %s400 = smul.addr %s399, 128
          %s401 = scalar_lea.hbm %s0, %s400
          %s402 = sshll.u32 %s394, 4
          %s403 = int_to_ptr.vmem [resolvable:$true] %s402
          %408 = dma.hbm_to_vmem [thread:$0]  %s401, 512, %s403, %s391, 256, 256, 16
        $region52: #{tpu_custom_call.1} parent=47 // pred_fallthru
          _
        // Predicated region
        $region53: #{tpu_custom_call.1} parent=47 // pred_check
          %p409 = pneg %p78
        $region54: #{tpu_custom_call.1} parent=47 // pred_check_branch
          %411 = sbr.rel (%p409) target = $region56
        $region55: #{tpu_custom_call.1} parent=47 // pred_region
          %s412 = sand.u32 %s32, 1
          %s413 = scalar_lea.sflag [#allocation6], %s412
          %s414 = sand.u32 %s68, 1
          %s415 = smul.addr %s414, 16
          %s416 = scalar_lea.vmem [#allocation5], %s415
          %s417 = smul.u32 2, %s32
          %s419 = ssub.s32 256, 256
          %420 = vsyncadd %s413, %s419
          %s421 = smul.addr %s417, 128
          %s422 = scalar_lea.hbm %s1, %s421
          %s423 = sshll.u32 %s416, 4
          %s424 = int_to_ptr.vmem [resolvable:$true] %s423
          %429 = dma.hbm_to_vmem [thread:$0]  %s422, 256, %s424, %s413, 128, 128, 8
        $region56: #{tpu_custom_call.1} parent=47 // pred_fallthru
          _
      $region48: #{tpu_custom_call.1} parent=5 // pred_fallthru
        _
      %p430 = scmp.le.s32.totalorder 1, %s32
      %p431 = scmp.lt.s32.totalorder %s32, 3
      %p432 = pnand %p430, %p431
      %p433 = pneg %p432
      // Predicated region
      $region57: #{tpu_custom_call.1} parent=5 // pred_check
        _
      $region58: #{tpu_custom_call.1} parent=5 // pred_check_branch
        %435 = sbr.rel (%p432) target = $region60
      $region59: #{tpu_custom_call.1} parent=5 // pred_region
        %s436 = ssub.s32 %s32, 1
        %s437 = sand.u32 %s45, 1
        %s438 = scalar_lea.sflag [#allocation3], %s437
        %s439 = sand.u32 %s45, 1
        %s440 = smul.addr %s439, 32
        %s441 = scalar_lea.vmem [#allocation2], %s440
        // Predicated region
        $region61: #{tpu_custom_call.1} parent=59 // pred_check
          %p442 = pneg %p58
        $region62: #{tpu_custom_call.1} parent=59 // pred_check_branch
          %444 = sbr.rel (%p442) target = $region64
        $region63: #{tpu_custom_call.1} parent=59 // pred_region
          %445 = dma.done %s438, 512
        $region64: #{tpu_custom_call.1} parent=59 // pred_fallthru
          _
        %s446 = sand.u32 %s37, 1
        %s447 = scalar_lea.sflag [#allocation6], %s446
        %s448 = sand.u32 %s71, 1
        %s449 = smul.addr %s448, 16
        %s450 = scalar_lea.vmem [#allocation5], %s449
        // Predicated region
        $region65: #{tpu_custom_call.1} parent=59 // pred_check
          %p451 = pneg %p84
        $region66: #{tpu_custom_call.1} parent=59 // pred_check_branch
          %453 = sbr.rel (%p451) target = $region68
        $region67: #{tpu_custom_call.1} parent=59 // pred_region
          %454 = dma.done %s447, 256
        $region68: #{tpu_custom_call.1} parent=59 // pred_fallthru
          _
        // Predicated region
        $region69: #{tpu_custom_call.1} parent=59 // pred_check
          %p455 = pneg %p105
        $region70: #{tpu_custom_call.1} parent=59 // pred_check_branch
          %457 = sbr.rel (%p455) target = $region72
        $region71: #{tpu_custom_call.1} parent=59 // pred_region
          %458 = dma.done [#allocation6], 4096
        $region72: #{tpu_custom_call.1} parent=59 // pred_fallthru
          _
        // Predicated region
        $region73: #{tpu_custom_call.1} parent=59 // pred_check
          %p459 = pneg %p147
        $region74: #{tpu_custom_call.1} parent=59 // pred_check_branch
          %461 = sbr.rel (%p459) target = $region76
        $region75: #{tpu_custom_call.1} parent=59 // pred_region
          %462 = dma.done [#allocation9], 4096
        $region76: #{tpu_custom_call.1} parent=59 // pred_fallthru
          _
        // Predicated region
        $region77: #{tpu_custom_call.1} parent=59 // pred_check
          %p463 = pneg %p189
        $region78: #{tpu_custom_call.1} parent=59 // pred_check_branch
          %465 = sbr.rel (%p463) target = $region80
        $region79: #{tpu_custom_call.1} parent=59 // pred_region
          %466 = dma.done [#allocation9], 2048
        $region80: #{tpu_custom_call.1} parent=59 // pred_fallthru
          _
        // Predicated region
        $region81: #{tpu_custom_call.1} parent=59 // pred_check
          %p467 = pneg %p231
        $region82: #{tpu_custom_call.1} parent=59 // pred_check_branch
          %469 = sbr.rel (%p467) target = $region84
        $region83: #{tpu_custom_call.1} parent=59 // pred_region
          %470 = dma.done [#allocation12], 4096
        $region84: #{tpu_custom_call.1} parent=59 // pred_fallthru
          _
        %s471 = sand.u32 %s45, 1
        %s472 = scalar_lea.sflag [#allocation3], %s471
        %s473 = sand.u32 %s45, 1
        %s474 = smul.addr %s473, 32
        %s475 = scalar_lea.vmem [#allocation2], %s474
        %p476 = pneg %p58
        %p477 = pneg %p55
        %s478 = sand.u32 %s37, 1
        %s479 = scalar_lea.sflag [#allocation6], %s478
        %s480 = sand.u32 %s71, 1
        %s481 = smul.addr %s480, 16
        %s482 = scalar_lea.vmem [#allocation5], %s481
        %p483 = pneg %p84
        %p484 = pneg %p81
        %p485 = pneg %p105
        %p486 = pneg %p102
        %p487 = pneg %p126
        %p488 = pneg %p123
        %p489 = pneg %p147
        %p490 = pneg %p144
        %p491 = pneg %p168
        %p492 = pneg %p165
        %p493 = pneg %p189
        %p494 = pneg %p186
        %p495 = pneg %p210
        %p496 = pneg %p207
        %p497 = pneg %p231
        %p498 = pneg %p228
        %p499 = pneg %p252
        %p500 = pneg %p249
        %p501 = pneg %p278
        %p502 = pneg %p275
        %s503 = sand.u32 %s265, 1
        %s504 = scalar_lea.sflag [#allocation4], %s503
        %s505 = sand.u32 %s265, 1
        %s506 = smul.addr %s505, 32
        %s507 = scalar_lea.vmem [#allocation13], %s506
        %p508 = pneg %p304
        %p509 = pneg %p301
        %s510 = sand.u32 %s291, 1
        %s511 = scalar_lea.sflag [#allocation15], %s510
        %s512 = sand.u32 %s291, 1
        %s513 = smul.addr %s512, 32
        %s514 = scalar_lea.vmem [#allocation14], %s513
        %s515 = smul.u32 2, %s37
        %s516 = smul.u32 2, %s37
        %s517 = smul.u32 2, %s37
        %s518 = smul.u32 2, %s37
        %v519 = vld [vmem:[%s441] sm:$0xff]
        %v520 = vld [vmem:[%s441 + $0x8] sm:$0xff]
        %v521 = vld [vmem:[%s441 + $0x10] sm:$0xff]
        %v522 = vld [vmem:[%s441 + $0x18] sm:$0xff]
        %v523 = vld [vmem:[#allocation7] sm:$0xff]
        %v524 = vld [vmem:[#allocation7 + $0x8] sm:$0xff]
        %v525 = vld [vmem:[#allocation7 + $0x10] sm:$0xff]
        %v526 = vld [vmem:[#allocation7 + $0x18] sm:$0xff]
        %v527 = vld [vmem:[#allocation7 + $0x20] sm:$0xff]
        %v528 = vld [vmem:[#allocation7 + $0x28] sm:$0xff]
        %v529 = vld [vmem:[#allocation7 + $0x30] sm:$0xff]
        %v530 = vld [vmem:[#allocation7 + $0x38] sm:$0xff]
        %v531 = vld [vmem:[#allocation7 + $0x40] sm:$0xff]
        %v532 = vld [vmem:[#allocation7 + $0x48] sm:$0xff]
        %v533 = vld [vmem:[#allocation7 + $0x50] sm:$0xff]
        %v534 = vld [vmem:[#allocation7 + $0x58] sm:$0xff]
        %v535 = vld [vmem:[#allocation7 + $0x60] sm:$0xff]
        %v536 = vld [vmem:[#allocation7 + $0x68] sm:$0xff]
        %v537 = vld [vmem:[#allocation7 + $0x70] sm:$0xff]
        %v538 = vld [vmem:[#allocation7 + $0x78] sm:$0xff]
        %v539 = vld [vmem:[#allocation7 + $0x80] sm:$0xff]
        %v540 = vld [vmem:[#allocation7 + $0x88] sm:$0xff]
        %v541 = vld [vmem:[#allocation7 + $0x90] sm:$0xff]
        %v542 = vld [vmem:[#allocation7 + $0x98] sm:$0xff]
        %v543 = vld [vmem:[#allocation7 + $0xa0] sm:$0xff]
        %v544 = vld [vmem:[#allocation7 + $0xa8] sm:$0xff]
        %v545 = vld [vmem:[#allocation7 + $0xb0] sm:$0xff]
        %v546 = vld [vmem:[#allocation7 + $0xb8] sm:$0xff]
        %v547 = vld [vmem:[#allocation7 + $0xc0] sm:$0xff]
        %v548 = vld [vmem:[#allocation7 + $0xc8] sm:$0xff]
        %v549 = vld [vmem:[#allocation7 + $0xd0] sm:$0xff]
        %v550 = vld [vmem:[#allocation7 + $0xd8] sm:$0xff]
        %v551 = vld [vmem:[#allocation7 + $0xe0] sm:$0xff]
        %v552 = vld [vmem:[#allocation7 + $0xe8] sm:$0xff]
        %v553 = vld [vmem:[#allocation7 + $0xf0] sm:$0xff]
        %v554 = vld [vmem:[#allocation7 + $0xf8] sm:$0xff]
        %v555 = vld [vmem:[%s3] sm:$0x1]
        %v557 = vlaneseq
        %v558 = vshrl.u32 %v557, 7
        %v559 = vsub.s32 0, %v558
        %v560 = vrot.slane %v555, %v559
        %562 = vmatprep.subr.mxu0 0.0
        %563 = vmatpush1.msra.mxu0 %v538
        %564 = vmatprep.subr.mxu0 0.0
        %565 = vmatpush1.msra.mxu0 %v537
        %566 = vmatprep.subr.mxu0 0.0
        %567 = vmatpush1.msra.mxu0 %v536
        %568 = vmatprep.subr.mxu0 0.0
        %569 = vmatpush1.msra.mxu0 %v535
        %570 = vmatprep.subr.mxu0 0.0
        %571 = vmatpush1.msra.mxu0 %v534
        %572 = vmatprep.subr.mxu0 0.0
        %573 = vmatpush1.msra.mxu0 %v533
        %574 = vmatprep.subr.mxu0 0.0
        %575 = vmatpush1.msra.mxu0 %v532
        %576 = vmatprep.subr.mxu0 0.0
        %577 = vmatpush1.msra.mxu0 %v531
        %578 = vmatprep.subr.mxu0 0.0
        %579 = vmatpush1.msra.mxu0 %v530
        %580 = vmatprep.subr.mxu0 0.0
        %581 = vmatpush1.msra.mxu0 %v529
        %582 = vmatprep.subr.mxu0 0.0
        %583 = vmatpush1.msra.mxu0 %v528
        %584 = vmatprep.subr.mxu0 0.0
        %585 = vmatpush1.msra.mxu0 %v527
        %586 = vmatprep.subr.mxu0 0.0
        %587 = vmatpush1.msra.mxu0 %v526
        %588 = vmatprep.subr.mxu0 0.0
        %589 = vmatpush1.msra.mxu0 %v525
        %590 = vmatprep.subr.mxu0 0.0
        %591 = vmatpush1.msra.mxu0 %v524
        %592 = vmatprep.subr.mxu0 0.0
        %593 = vmatpush1.msra.mxu0 %v523
        %594 = vmatprep.subr.mxu0 0.0
        %595 = vmatpush2.msra.mxu0 %v554
        %596 = vmatprep.subr.mxu0 0.0
        %597 = vmatpush2.msra.mxu0 %v553
        %598 = vmatprep.subr.mxu0 0.0
        %599 = vmatpush2.msra.mxu0 %v552
        %600 = vmatprep.subr.mxu0 0.0
        %601 = vmatpush2.msra.mxu0 %v551
        %602 = vmatprep.subr.mxu0 0.0
        %603 = vmatpush2.msra.mxu0 %v550
        %604 = vmatprep.subr.mxu0 0.0
        %605 = vmatpush2.msra.mxu0 %v549
        %606 = vmatprep.subr.mxu0 0.0
        %607 = vmatpush2.msra.mxu0 %v548
        %608 = vmatprep.subr.mxu0 0.0
        %609 = vmatpush2.msra.mxu0 %v547
        %610 = vmatprep.subr.mxu0 0.0
        %611 = vmatpush2.msra.mxu0 %v546
        %612 = vmatprep.subr.mxu0 0.0
        %613 = vmatpush2.msra.mxu0 %v545
        %614 = vmatprep.subr.mxu0 0.0
        %615 = vmatpush2.msra.mxu0 %v544
        %616 = vmatprep.subr.mxu0 0.0
        %617 = vmatpush2.msra.mxu0 %v543
        %618 = vmatprep.subr.mxu0 0.0
        %619 = vmatpush2.msra.mxu0 %v542
        %620 = vmatprep.subr.mxu0 0.0
        %621 = vmatpush2.msra.mxu0 %v541
        %622 = vmatprep.subr.mxu0 0.0
        %623 = vmatpush2.msra.mxu0 %v540
        %624 = vmatprep.subr.mxu0 0.0
        %625 = vmatpush2.msra.mxu0 %v539
        %626 = vmatprep.mubr.f32.mxu0 %v520
        %627 = vmatmul.mubr.f32.gmra.mxu0 %v519
        %v628 = vpop.f32.mrf.mxu0
        %v629 = vadd.f32 %v560, %v628
        %v630 = vpop.f32.mrf.mxu0
        %631 = vmatprep.mubr.f32.mxu0 %v522
        %632 = vmatmul.mubr.f32.gmra.mxu0 %v521
        %v633 = vpop.f32.mrf.mxu0
        %v634 = vadd.f32 %v560, %v633
        %v635 = vpop.f32.mrf.mxu0
        %636 = vdwg.mxu0
        %v637 = vmax.f32 %v629, 0.0
        %v638 = vmax.f32 %v634, 0.0
        %v639 = vld [vmem:[#allocation8] sm:$0xff]
        %v640 = vld [vmem:[#allocation8 + $0x8] sm:$0xff]
        %v641 = vld [vmem:[#allocation8 + $0x10] sm:$0xff]
        %v642 = vld [vmem:[#allocation8 + $0x18] sm:$0xff]
        %v643 = vld [vmem:[#allocation8 + $0x20] sm:$0xff]
        %v644 = vld [vmem:[#allocation8 + $0x28] sm:$0xff]
        %v645 = vld [vmem:[#allocation8 + $0x30] sm:$0xff]
        %v646 = vld [vmem:[#allocation8 + $0x38] sm:$0xff]
        %v647 = vld [vmem:[#allocation8 + $0x40] sm:$0xff]
        %v648 = vld [vmem:[#allocation8 + $0x48] sm:$0xff]
        %v649 = vld [vmem:[#allocation8 + $0x50] sm:$0xff]
        %v650 = vld [vmem:[#allocation8 + $0x58] sm:$0xff]
        %v651 = vld [vmem:[#allocation8 + $0x60] sm:$0xff]
        %v652 = vld [vmem:[#allocation8 + $0x68] sm:$0xff]
        %v653 = vld [vmem:[#allocation8 + $0x70] sm:$0xff]
        %v654 = vld [vmem:[#allocation8 + $0x78] sm:$0xff]
        %v655 = vld [vmem:[#allocation8 + $0x80] sm:$0xff]
        %v656 = vld [vmem:[#allocation8 + $0x88] sm:$0xff]
        %v657 = vld [vmem:[#allocation8 + $0x90] sm:$0xff]
        %v658 = vld [vmem:[#allocation8 + $0x98] sm:$0xff]
        %v659 = vld [vmem:[#allocation8 + $0xa0] sm:$0xff]
        %v660 = vld [vmem:[#allocation8 + $0xa8] sm:$0xff]
        %v661 = vld [vmem:[#allocation8 + $0xb0] sm:$0xff]
        %v662 = vld [vmem:[#allocation8 + $0xb8] sm:$0xff]
        %v663 = vld [vmem:[#allocation8 + $0xc0] sm:$0xff]
        %v664 = vld [vmem:[#allocation8 + $0xc8] sm:$0xff]
        %v665 = vld [vmem:[#allocation8 + $0xd0] sm:$0xff]
        %v666 = vld [vmem:[#allocation8 + $0xd8] sm:$0xff]
        %v667 = vld [vmem:[#allocation8 + $0xe0] sm:$0xff]
        %v668 = vld [vmem:[#allocation8 + $0xe8] sm:$0xff]
        %v669 = vld [vmem:[#allocation8 + $0xf0] sm:$0xff]
        %v670 = vld [vmem:[#allocation8 + $0xf8] sm:$0xff]
        %v671 = vld [vmem:[%s5] sm:$0x3]
        %v673 = vlaneseq
        %v674 = vshrl.u32 %v673, 7
        %v675 = vsub.s32 0, %v674
        %v676 = vrot.slane %v671, %v675
        %v677 = vlaneseq
        %v678 = vshrl.u32 %v677, 7
        %v679 = vsub.s32 1, %v678
        %v680 = vrot.slane %v671, %v679
        %683 = vmatprep.subr.mxu0 %v670
        %684 = vmatpush1.msra.mxu0 %v669
        %685 = vmatprep.subr.mxu0 %v668
        %686 = vmatpush1.msra.mxu0 %v667
        %687 = vmatprep.subr.mxu0 %v666
        %688 = vmatpush1.msra.mxu0 %v665
        %689 = vmatprep.subr.mxu0 %v664
        %690 = vmatpush1.msra.mxu0 %v663
        %691 = vmatprep.subr.mxu0 %v662
        %692 = vmatpush1.msra.mxu0 %v661
        %693 = vmatprep.subr.mxu0 %v660
        %694 = vmatpush1.msra.mxu0 %v659
        %695 = vmatprep.subr.mxu0 %v658
        %696 = vmatpush1.msra.mxu0 %v657
        %697 = vmatprep.subr.mxu0 %v656
        %698 = vmatpush1.msra.mxu0 %v655
        %699 = vmatprep.subr.mxu0 %v654
        %700 = vmatpush1.msra.mxu0 %v653
        %701 = vmatprep.subr.mxu0 %v652
        %702 = vmatpush1.msra.mxu0 %v651
        %703 = vmatprep.subr.mxu0 %v650
        %704 = vmatpush1.msra.mxu0 %v649
        %705 = vmatprep.subr.mxu0 %v648
        %706 = vmatpush1.msra.mxu0 %v647
        %707 = vmatprep.subr.mxu0 %v646
        %708 = vmatpush1.msra.mxu0 %v645
        %709 = vmatprep.subr.mxu0 %v644
        %710 = vmatpush1.msra.mxu0 %v643
        %711 = vmatprep.subr.mxu0 %v642
        %712 = vmatpush1.msra.mxu0 %v641
        %713 = vmatprep.subr.mxu0 %v640
        %714 = vmatpush1.msra.mxu0 %v639
        %715 = vmatprep.subr.mxu0 0.0
        %716 = vmatpush2.msra.mxu0 0.0
        %717 = vmatprep.subr.mxu0 0.0
        %718 = vmatpush2.msra.mxu0 0.0
        %719 = vmatprep.subr.mxu0 0.0
        %720 = vmatpush2.msra.mxu0 0.0
        %721 = vmatprep.subr.mxu0 0.0
        %722 = vmatpush2.msra.mxu0 0.0
        %723 = vmatprep.subr.mxu0 0.0
        %724 = vmatpush2.msra.mxu0 0.0
        %725 = vmatprep.subr.mxu0 0.0
        %726 = vmatpush2.msra.mxu0 0.0
        %727 = vmatprep.subr.mxu0 0.0
        %728 = vmatpush2.msra.mxu0 0.0
        %729 = vmatprep.subr.mxu0 0.0
        %730 = vmatpush2.msra.mxu0 0.0
        %731 = vmatprep.subr.mxu0 0.0
        %732 = vmatpush2.msra.mxu0 0.0
        %733 = vmatprep.subr.mxu0 0.0
        %734 = vmatpush2.msra.mxu0 0.0
        %735 = vmatprep.subr.mxu0 0.0
        %736 = vmatpush2.msra.mxu0 0.0
        %737 = vmatprep.subr.mxu0 0.0
        %738 = vmatpush2.msra.mxu0 0.0
        %739 = vmatprep.subr.mxu0 0.0
        %740 = vmatpush2.msra.mxu0 0.0
        %741 = vmatprep.subr.mxu0 0.0
        %742 = vmatpush2.msra.mxu0 0.0
        %743 = vmatprep.subr.mxu0 0.0
        %744 = vmatpush2.msra.mxu0 0.0
        %745 = vmatprep.subr.mxu0 0.0
        %746 = vmatpush2.msra.mxu0 0.0
        %747 = vmatprep.mubr.f32.mxu0 0.0
        %748 = vmatmul.mubr.f32.gmra.mxu0 %v637
        %v749 = vpop.f32.mrf.mxu0
        %v750 = vadd.f32 %v676, %v749
        %v751 = vpop.f32.mrf.mxu0
        %v752 = vadd.f32 %v680, %v751
        %753 = vmatprep.mubr.f32.mxu0 0.0
        %754 = vmatmul.mubr.f32.gmra.mxu0 %v638
        %v755 = vpop.f32.mrf.mxu0
        %v756 = vadd.f32 %v676, %v755
        %v757 = vpop.f32.mrf.mxu0
        %v758 = vadd.f32 %v680, %v757
        %759 = vdwg.mxu0
        %760 = vst [vmem:[%s514] sm:$0xff] %v750
        %761 = vst [vmem:[%s514 + $0x8] sm:$0xff] %v752
        %762 = vst [vmem:[%s514 + $0x10] sm:$0xff] %v756
        %763 = vst [vmem:[%s514 + $0x18] sm:$0xff] %v758
        %v764 = vld [vmem:[%s450] sm:$0xff]
        %v765 = vld [vmem:[%s450 + $0x8] sm:$0xff]
        %v766 = vmul.f32 %v752, 0.5
        %v767 = vmul.f32 %v758, 0.5
        %v768 = vmul.f32 %v766, 1.442695
        %v769 = vpow.pop %v768
        %v770 = vmul.f32 %v767, 1.442695
        %v771 = vpow.pop %v770
        %v772 = vmul.f32 %v764, %v769
        %v773 = vmul.f32 %v765, %v771
        %v774 = vadd.f32 %v750, %v772
        %v775 = vadd.f32 %v756, %v773
        %v776 = vld [vmem:[#allocation10] sm:$0xff]
        %v777 = vld [vmem:[#allocation10 + $0x8] sm:$0xff]
        %v778 = vld [vmem:[#allocation10 + $0x10] sm:$0xff]
        %v779 = vld [vmem:[#allocation10 + $0x18] sm:$0xff]
        %v780 = vld [vmem:[#allocation10 + $0x20] sm:$0xff]
        %v781 = vld [vmem:[#allocation10 + $0x28] sm:$0xff]
        %v782 = vld [vmem:[#allocation10 + $0x30] sm:$0xff]
        %v783 = vld [vmem:[#allocation10 + $0x38] sm:$0xff]
        %v784 = vld [vmem:[#allocation10 + $0x40] sm:$0xff]
        %v785 = vld [vmem:[#allocation10 + $0x48] sm:$0xff]
        %v786 = vld [vmem:[#allocation10 + $0x50] sm:$0xff]
        %v787 = vld [vmem:[#allocation10 + $0x58] sm:$0xff]
        %v788 = vld [vmem:[#allocation10 + $0x60] sm:$0xff]
        %v789 = vld [vmem:[#allocation10 + $0x68] sm:$0xff]
        %v790 = vld [vmem:[#allocation10 + $0x70] sm:$0xff]
        %v791 = vld [vmem:[#allocation10 + $0x78] sm:$0xff]
        %v792 = vld [vmem:[%s7] sm:$0x1]
        %v794 = vlaneseq
        %v795 = vshrl.u32 %v794, 7
        %v796 = vsub.s32 0, %v795
        %v797 = vrot.slane %v792, %v796
        %799 = vmatprep.subr.mxu0 0.0
        %800 = vmatpush1.msra.mxu0 %v791
        %801 = vmatprep.subr.mxu0 0.0
        %802 = vmatpush1.msra.mxu0 %v790
        %803 = vmatprep.subr.mxu0 0.0
        %804 = vmatpush1.msra.mxu0 %v789
        %805 = vmatprep.subr.mxu0 0.0
        %806 = vmatpush1.msra.mxu0 %v788
        %807 = vmatprep.subr.mxu0 0.0
        %808 = vmatpush1.msra.mxu0 %v787
        %809 = vmatprep.subr.mxu0 0.0
        %810 = vmatpush1.msra.mxu0 %v786
        %811 = vmatprep.subr.mxu0 0.0
        %812 = vmatpush1.msra.mxu0 %v785
        %813 = vmatprep.subr.mxu0 0.0
        %814 = vmatpush1.msra.mxu0 %v784
        %815 = vmatprep.subr.mxu0 0.0
        %816 = vmatpush1.msra.mxu0 %v783
        %817 = vmatprep.subr.mxu0 0.0
        %818 = vmatpush1.msra.mxu0 %v782
        %819 = vmatprep.subr.mxu0 0.0
        %820 = vmatpush1.msra.mxu0 %v781
        %821 = vmatprep.subr.mxu0 0.0
        %822 = vmatpush1.msra.mxu0 %v780
        %823 = vmatprep.subr.mxu0 0.0
        %824 = vmatpush1.msra.mxu0 %v779
        %825 = vmatprep.subr.mxu0 0.0
        %826 = vmatpush1.msra.mxu0 %v778
        %827 = vmatprep.subr.mxu0 0.0
        %828 = vmatpush1.msra.mxu0 %v777
        %829 = vmatprep.subr.mxu0 0.0
        %830 = vmatpush1.msra.mxu0 %v776
        %831 = vmatprep.subr.mxu0 0.0
        %832 = vmatpush2.msra.mxu0 0.0
        %833 = vmatprep.subr.mxu0 0.0
        %834 = vmatpush2.msra.mxu0 0.0
        %835 = vmatprep.subr.mxu0 0.0
        %836 = vmatpush2.msra.mxu0 0.0
        %837 = vmatprep.subr.mxu0 0.0
        %838 = vmatpush2.msra.mxu0 0.0
        %839 = vmatprep.subr.mxu0 0.0
        %840 = vmatpush2.msra.mxu0 0.0
        %841 = vmatprep.subr.mxu0 0.0
        %842 = vmatpush2.msra.mxu0 0.0
        %843 = vmatprep.subr.mxu0 0.0
        %844 = vmatpush2.msra.mxu0 0.0
        %845 = vmatprep.subr.mxu0 0.0
        %846 = vmatpush2.msra.mxu0 0.0
        %847 = vmatprep.subr.mxu0 0.0
        %848 = vmatpush2.msra.mxu0 0.0
        %849 = vmatprep.subr.mxu0 0.0
        %850 = vmatpush2.msra.mxu0 0.0
        %851 = vmatprep.subr.mxu0 0.0
        %852 = vmatpush2.msra.mxu0 0.0
        %853 = vmatprep.subr.mxu0 0.0
        %854 = vmatpush2.msra.mxu0 0.0
        %855 = vmatprep.subr.mxu0 0.0
        %856 = vmatpush2.msra.mxu0 0.0
        %857 = vmatprep.subr.mxu0 0.0
        %858 = vmatpush2.msra.mxu0 0.0
        %859 = vmatprep.subr.mxu0 0.0
        %860 = vmatpush2.msra.mxu0 0.0
        %861 = vmatprep.subr.mxu0 0.0
        %862 = vmatpush2.msra.mxu0 0.0
        %863 = vmatprep.mubr.f32.mxu0 0.0
        %864 = vmatmul.mubr.f32.gmra.mxu0 %v774
        %v865 = vpop.f32.mrf.mxu0
        %v866 = vadd.f32 %v797, %v865
        %v867 = vpop.f32.mrf.mxu0
        %868 = vmatprep.mubr.f32.mxu0 0.0
        %869 = vmatmul.mubr.f32.gmra.mxu0 %v775
        %v870 = vpop.f32.mrf.mxu0
        %v871 = vadd.f32 %v797, %v870
        %v872 = vpop.f32.mrf.mxu0
        %873 = vdwg.mxu0
        %v874 = vmax.f32 %v866, 0.0
        %v875 = vmax.f32 %v871, 0.0
        %v876 = vld [vmem:[#allocation11] sm:$0xff]
        %v877 = vld [vmem:[#allocation11 + $0x8] sm:$0xff]
        %v878 = vld [vmem:[#allocation11 + $0x10] sm:$0xff]
        %v879 = vld [vmem:[#allocation11 + $0x18] sm:$0xff]
        %v880 = vld [vmem:[#allocation11 + $0x20] sm:$0xff]
        %v881 = vld [vmem:[#allocation11 + $0x28] sm:$0xff]
        %v882 = vld [vmem:[#allocation11 + $0x30] sm:$0xff]
        %v883 = vld [vmem:[#allocation11 + $0x38] sm:$0xff]
        %v884 = vld [vmem:[#allocation11 + $0x40] sm:$0xff]
        %v885 = vld [vmem:[#allocation11 + $0x48] sm:$0xff]
        %v886 = vld [vmem:[#allocation11 + $0x50] sm:$0xff]
        %v887 = vld [vmem:[#allocation11 + $0x58] sm:$0xff]
        %v888 = vld [vmem:[#allocation11 + $0x60] sm:$0xff]
        %v889 = vld [vmem:[#allocation11 + $0x68] sm:$0xff]
        %v890 = vld [vmem:[#allocation11 + $0x70] sm:$0xff]
        %v891 = vld [vmem:[#allocation11 + $0x78] sm:$0xff]
        %v892 = vld [vmem:[#allocation11 + $0x80] sm:$0xff]
        %v893 = vld [vmem:[#allocation11 + $0x88] sm:$0xff]
        %v894 = vld [vmem:[#allocation11 + $0x90] sm:$0xff]
        %v895 = vld [vmem:[#allocation11 + $0x98] sm:$0xff]
        %v896 = vld [vmem:[#allocation11 + $0xa0] sm:$0xff]
        %v897 = vld [vmem:[#allocation11 + $0xa8] sm:$0xff]
        %v898 = vld [vmem:[#allocation11 + $0xb0] sm:$0xff]
        %v899 = vld [vmem:[#allocation11 + $0xb8] sm:$0xff]
        %v900 = vld [vmem:[#allocation11 + $0xc0] sm:$0xff]
        %v901 = vld [vmem:[#allocation11 + $0xc8] sm:$0xff]
        %v902 = vld [vmem:[#allocation11 + $0xd0] sm:$0xff]
        %v903 = vld [vmem:[#allocation11 + $0xd8] sm:$0xff]
        %v904 = vld [vmem:[#allocation11 + $0xe0] sm:$0xff]
        %v905 = vld [vmem:[#allocation11 + $0xe8] sm:$0xff]
        %v906 = vld [vmem:[#allocation11 + $0xf0] sm:$0xff]
        %v907 = vld [vmem:[#allocation11 + $0xf8] sm:$0xff]
        %v908 = vld [vmem:[%s9] sm:$0x3]
        %v910 = vlaneseq
        %v911 = vshrl.u32 %v910, 7
        %v912 = vsub.s32 0, %v911
        %v913 = vrot.slane %v908, %v912
        %v914 = vlaneseq
        %v915 = vshrl.u32 %v914, 7
        %v916 = vsub.s32 1, %v915
        %v917 = vrot.slane %v908, %v916
        %920 = vmatprep.subr.mxu0 %v907
        %921 = vmatpush1.msra.mxu0 %v906
        %922 = vmatprep.subr.mxu0 %v905
        %923 = vmatpush1.msra.mxu0 %v904
        %924 = vmatprep.subr.mxu0 %v903
        %925 = vmatpush1.msra.mxu0 %v902
        %926 = vmatprep.subr.mxu0 %v901
        %927 = vmatpush1.msra.mxu0 %v900
        %928 = vmatprep.subr.mxu0 %v899
        %929 = vmatpush1.msra.mxu0 %v898
        %930 = vmatprep.subr.mxu0 %v897
        %931 = vmatpush1.msra.mxu0 %v896
        %932 = vmatprep.subr.mxu0 %v895
        %933 = vmatpush1.msra.mxu0 %v894
        %934 = vmatprep.subr.mxu0 %v893
        %935 = vmatpush1.msra.mxu0 %v892
        %936 = vmatprep.subr.mxu0 %v891
        %937 = vmatpush1.msra.mxu0 %v890
        %938 = vmatprep.subr.mxu0 %v889
        %939 = vmatpush1.msra.mxu0 %v888
        %940 = vmatprep.subr.mxu0 %v887
        %941 = vmatpush1.msra.mxu0 %v886
        %942 = vmatprep.subr.mxu0 %v885
        %943 = vmatpush1.msra.mxu0 %v884
        %944 = vmatprep.subr.mxu0 %v883
        %945 = vmatpush1.msra.mxu0 %v882
        %946 = vmatprep.subr.mxu0 %v881
        %947 = vmatpush1.msra.mxu0 %v880
        %948 = vmatprep.subr.mxu0 %v879
        %949 = vmatpush1.msra.mxu0 %v878
        %950 = vmatprep.subr.mxu0 %v877
        %951 = vmatpush1.msra.mxu0 %v876
        %952 = vmatprep.subr.mxu0 0.0
        %953 = vmatpush2.msra.mxu0 0.0
        %954 = vmatprep.subr.mxu0 0.0
        %955 = vmatpush2.msra.mxu0 0.0
        %956 = vmatprep.subr.mxu0 0.0
        %957 = vmatpush2.msra.mxu0 0.0
        %958 = vmatprep.subr.mxu0 0.0
        %959 = vmatpush2.msra.mxu0 0.0
        %960 = vmatprep.subr.mxu0 0.0
        %961 = vmatpush2.msra.mxu0 0.0
        %962 = vmatprep.subr.mxu0 0.0
        %963 = vmatpush2.msra.mxu0 0.0
        %964 = vmatprep.subr.mxu0 0.0
        %965 = vmatpush2.msra.mxu0 0.0
        %966 = vmatprep.subr.mxu0 0.0
        %967 = vmatpush2.msra.mxu0 0.0
        %968 = vmatprep.subr.mxu0 0.0
        %969 = vmatpush2.msra.mxu0 0.0
        %970 = vmatprep.subr.mxu0 0.0
        %971 = vmatpush2.msra.mxu0 0.0
        %972 = vmatprep.subr.mxu0 0.0
        %973 = vmatpush2.msra.mxu0 0.0
        %974 = vmatprep.subr.mxu0 0.0
        %975 = vmatpush2.msra.mxu0 0.0
        %976 = vmatprep.subr.mxu0 0.0
        %977 = vmatpush2.msra.mxu0 0.0
        %978 = vmatprep.subr.mxu0 0.0
        %979 = vmatpush2.msra.mxu0 0.0
        %980 = vmatprep.subr.mxu0 0.0
        %981 = vmatpush2.msra.mxu0 0.0
        %982 = vmatprep.subr.mxu0 0.0
        %983 = vmatpush2.msra.mxu0 0.0
        %984 = vmatprep.mubr.f32.mxu0 0.0
        %985 = vmatmul.mubr.f32.gmra.mxu0 %v874
        %v986 = vpop.f32.mrf.mxu0
        %v987 = vadd.f32 %v913, %v986
        %v988 = vpop.f32.mrf.mxu0
        %v989 = vadd.f32 %v917, %v988
        %990 = vmatprep.mubr.f32.mxu0 0.0
        %991 = vmatmul.mubr.f32.gmra.mxu0 %v875
        %v992 = vpop.f32.mrf.mxu0
        %v993 = vadd.f32 %v913, %v992
        %v994 = vpop.f32.mrf.mxu0
        %v995 = vadd.f32 %v917, %v994
        %996 = vdwg.mxu0
        %v997 = vxor.u32 %v987, 2147483648
        %v998 = vxor.u32 %v989, 2147483648
        %v999 = vxor.u32 %v993, 2147483648
        %v1000 = vxor.u32 %v995, 2147483648
        %v1001 = vmul.f32 %v997, 1.442695
        %v1002 = vpow.pop %v1001
        %v1003 = vmul.f32 %v998, 1.442695
        %v1004 = vpow.pop %v1003
        %v1005 = vmul.f32 %v999, 1.442695
        %v1006 = vpow.pop %v1005
        %v1007 = vmul.f32 %v1000, 1.442695
        %v1008 = vpow.pop %v1007
        %v1009 = vadd.f32 %v1002, 1.0
        %v1010 = vadd.f32 %v1004, 1.0
        %v1011 = vadd.f32 %v1006, 1.0
        %v1012 = vadd.f32 %v1008, 1.0
        %v1013 = vrcp.pop %v1009
        %v1014 = vmul.f32 1.0, %v1013
        %v1015 = vrcp.pop %v1010
        %v1016 = vmul.f32 1.0, %v1015
        %v1017 = vrcp.pop %v1011
        %v1018 = vmul.f32 1.0, %v1017
        %v1019 = vrcp.pop %v1012
        %v1020 = vmul.f32 1.0, %v1019
        %1021 = vst [vmem:[%s507] sm:$0xff] %v1014
        %1022 = vst [vmem:[%s507 + $0x8] sm:$0xff] %v1016
        %1023 = vst [vmem:[%s507 + $0x10] sm:$0xff] %v1018
        %1024 = vst [vmem:[%s507 + $0x18] sm:$0xff] %v1020
        %s1025 = sand.u32 %s265, 1
        %s1026 = scalar_lea.sflag [#allocation4], %s1025
        %s1027 = sand.u32 %s265, 1
        %s1028 = smul.addr %s1027, 32
        %s1029 = scalar_lea.vmem [#allocation13], %s1028
        %s1030 = sand.u32 %s291, 1
        %s1031 = scalar_lea.sflag [#allocation15], %s1030
        %s1032 = sand.u32 %s291, 1
        %s1033 = smul.addr %s1032, 32
        %s1034 = scalar_lea.vmem [#allocation14], %s1033
        // Predicated region
        $region85: #{tpu_custom_call.1} parent=59 // pred_check
          %p1035 = pneg %p275
        $region86: #{tpu_custom_call.1} parent=59 // pred_check_branch
          %1037 = sbr.rel (%p1035) target = $region88
        $region87: #{tpu_custom_call.1} parent=59 // pred_region
          %s1038 = smul.u32 2, %s37
          %s1040 = ssub.s32 512, 512
          %1041 = vsyncadd %s1026, %s1040
          %s1042 = smul.addr %s1038, 2
          %s1043 = smul.addr %s1042, 128
          %s1044 = scalar_lea.hbm %s10, %s1043
          %s1045 = sshll.u32 %s1029, 4
          %s1046 = int_to_ptr.vmem [resolvable:$true] %s1045
          %1051 = dma.vmem_to_hbm [thread:$0]  %s1046, 512, %s1044, %s1026, 256, 256, 16
        $region88: #{tpu_custom_call.1} parent=59 // pred_fallthru
          _
        // Predicated region
        $region89: #{tpu_custom_call.1} parent=59 // pred_check
          %p1052 = pneg %p301
        $region90: #{tpu_custom_call.1} parent=59 // pred_check_branch
          %1054 = sbr.rel (%p1052) target = $region92
        $region91: #{tpu_custom_call.1} parent=59 // pred_region
          %s1055 = smul.u32 2, %s37
          %s1057 = ssub.s32 512, 512
          %1058 = vsyncadd %s1031, %s1057
          %s1059 = smul.addr %s1055, 2
          %s1060 = smul.addr %s1059, 128
          %s1061 = scalar_lea.hbm %s11, %s1060
          %s1062 = sshll.u32 %s1034, 4
          %s1063 = int_to_ptr.vmem [resolvable:$true] %s1062
          %1068 = dma.vmem_to_hbm [thread:$0]  %s1063, 512, %s1061, %s1031, 256, 256, 16
        $region92: #{tpu_custom_call.1} parent=59 // pred_fallthru
          _
      $region60: #{tpu_custom_call.1} parent=5 // pred_fallthru
        _
      %p1069 = scmp.le.s32.totalorder 2, %s32
      // Predicated region
      $region93: #{tpu_custom_call.1} parent=5 // pred_check
        %p1070 = pneg %p1069
      $region94: #{tpu_custom_call.1} parent=5 // pred_check_branch
        %1072 = sbr.rel (%p1070) target = $region96
      $region95: #{tpu_custom_call.1} parent=5 // pred_region
        %s1073 = ssub.s32 %s32, 2
        // Predicated region
        $region97: #{tpu_custom_call.1} parent=95 // pred_check
          %p1074 = pneg %p281
        $region98: #{tpu_custom_call.1} parent=95 // pred_check_branch
          %1076 = sbr.rel (%p1074) target = $region100
        $region99: #{tpu_custom_call.1} parent=95 // pred_region
          %s1077 = sand.u32 %s266, 1
          %s1078 = scalar_lea.sflag [#allocation4], %s1077
          %s1079 = sand.u32 %s266, 1
          %s1080 = smul.addr %s1079, 32
          %s1081 = scalar_lea.vmem [#allocation13], %s1080
          %1082 = dma.done %s1078, 512
        $region100: #{tpu_custom_call.1} parent=95 // pred_fallthru
          _
        // Predicated region
        $region101: #{tpu_custom_call.1} parent=95 // pred_check
          %p1083 = pneg %p307
        $region102: #{tpu_custom_call.1} parent=95 // pred_check_branch
          %1085 = sbr.rel (%p1083) target = $region104
        $region103: #{tpu_custom_call.1} parent=95 // pred_region
          %s1086 = sand.u32 %s292, 1
          %s1087 = scalar_lea.sflag [#allocation15], %s1086
          %s1088 = sand.u32 %s292, 1
          %s1089 = smul.addr %s1088, 32
          %s1090 = scalar_lea.vmem [#allocation14], %s1089
          %1091 = dma.done %s1087, 512
        $region104: #{tpu_custom_call.1} parent=95 // pred_fallthru
          _
      $region96: #{tpu_custom_call.1} parent=5 // pred_fallthru
        _
    $region6: #{tpu_custom_call.1} parent=1 // loop_footer
      %s36 = sadd.s32 1, %s32
    $region7: #{tpu_custom_call.1} parent=1 // loop_footer_branch
      %31 = sbr.rel target = $region3
    $region8: #{tpu_custom_call.1} parent=1 // loop_exit
      _
    %1092 = vsyncpa [#allocation3], 1
    %s1093 = scalar_lea.sflag [#allocation3], 1
    %1094 = vsyncpa %s1093, 1
    %1095 = vsyncpa [#allocation6], 1
    %s1096 = scalar_lea.sflag [#allocation6], 1
    %1097 = vsyncpa %s1096, 1
    %1098 = vsyncpa [#allocation9], 1
    %1099 = vsyncpa [#allocation12], 1
    %1100 = vsyncpa [#allocation4], 1
    %s1101 = scalar_lea.sflag [#allocation4], 1
    %1102 = vsyncpa %s1101, 1
    %1103 = vsyncpa [#allocation15], 1
    %s1104 = scalar_lea.sflag [#allocation15], 1
    %1105 = vsyncpa %s1104, 1

</llo_original>
